<compile_context>
chip_gen: v7x
topology: tpu7x:2x2x1
jax: 0.10.0
libtpu: 0.0.40
codegen_flags: <defaults>
</compile_context>

<pallas_src>
import functools

import jax
import jax.numpy as jnp
from jax.experimental import pallas as pl
from jax.experimental.pallas import tpu as pltpu

EPS = 1e-10

# Keep each double-buffered preds tile comfortably inside the default scoped VMEM
# on every generation (v5e 16 MiB, v6e 32 MiB, v7x 32 MiB scoped / 64 MiB physical).
_MAX_TILE_BYTES = 4 << 20  # per single preds buffer (x2 for double-buffering)
_MAX_TILE_ROWS = 2048


def _round_up(x, m):
    return ((x + m - 1) // m) * m


def _f1_loss_kernel(preds_ref, targs_ref, f1_ref, tp_acc, sp_acc, cnt_acc,
                    *, n_rows, tile_n):
    i = pl.program_id(0)

    @pl.when(i == 0)
    def _init():
        tp_acc[...] = jnp.zeros_like(tp_acc)
        sp_acc[...] = jnp.zeros_like(sp_acc)
        cnt_acc[...] = jnp.zeros_like(cnt_acc)

    p = preds_ref[...].astype(jnp.float32)            # (tile_n, C)
    t = targs_ref[...]                                # (tile_n, 1) int32
    tn, C = p.shape

    # softmax over classes (dim=1), divide pushed to the EUP via approx reciprocal.
    m = jnp.max(p, axis=1, keepdims=True)
    e = jnp.exp(p - m)
    inv = pl.reciprocal(jnp.sum(e, axis=1, keepdims=True), approx=True)
    p = e * inv

    # Mask rows that are padding in the (possibly partial) last tile.
    row = jax.lax.broadcasted_iota(jnp.int32, (tn, 1), 0) + i * tile_n
    valid = row < n_rows                               # (tile_n, 1) bool

    labels = jax.lax.broadcasted_iota(jnp.int32, (tn, C), 1)
    hit = jnp.logical_and(valid, t == labels)          # (tile_n, C) bool one-hot

    p = jnp.where(valid, p, 0.0)                       # zero padded rows (select, not mul)

    # Per-class accumulators over the batch axis (fp/fn recovered algebraically).
    tp_acc[...] += jnp.sum(jnp.where(hit, p, 0.0), axis=0, keepdims=True)
    sp_acc[...] += jnp.sum(p, axis=0, keepdims=True)
    cnt_acc[...] += jnp.sum(hit.astype(jnp.float32), axis=0, keepdims=True)

    @pl.when(i == pl.num_programs(0) - 1)
    def _finalize():
        tp = tp_acc[...]
        fp = sp_acc[...] - tp            # sum_c p  - tp
        fn = cnt_acc[...] - tp           # #targets - tp
        # (1, C) work only -> exact divides keep numerics tight at zero perf cost.
        precision = tp / (tp + fp + EPS)
        recall = tp / (tp + fn + EPS)
        f1 = 2.0 * precision * recall / (precision + recall + EPS)
        f1_ref[...] = jnp.clip(f1, EPS, 1.0 - EPS)


def f1_loss(preds, targs, *, tile_n=None):
    """preds: (N, C) float logits (f32 or bf16); targs: (N,) int class ids -> scalar loss."""
    # TODO(synk): the PyTorch module also "allows" preds.ndim == 1 / macro=False, but its
    # forward() only exercises the 2-D macro path (the 1-D path would raise in torch too).
    N, C = preds.shape
    targs2 = targs.astype(jnp.int32).reshape(N, 1)

    if tile_n is None:
        bytes_per_row = C * jnp.dtype(preds.dtype).itemsize
        budget_rows = max(8, _MAX_TILE_BYTES // max(1, bytes_per_row))
        tile_n = min(_round_up(N, 8), _round_up(min(_MAX_TILE_ROWS, budget_rows), 8))

    grid = (pl.cdiv(N, tile_n),)
    kernel = functools.partial(_f1_loss_kernel, n_rows=N, tile_n=tile_n)

    f1 = pl.pallas_call(
        kernel,
        out_shape=jax.ShapeDtypeStruct((1, C), jnp.float32),
        grid_spec=pltpu.PrefetchScalarGridSpec(
            num_scalar_prefetch=0,
            grid=grid,
            in_specs=[
                pl.BlockSpec((tile_n, C), lambda i: (i, 0)),
                pl.BlockSpec((tile_n, 1), lambda i: (i, 0)),
            ],
            out_specs=pl.BlockSpec((1, C), lambda i: (0, 0)),
            scratch_shapes=[
                pltpu.VMEM((1, C), jnp.float32),   # tp
                pltpu.VMEM((1, C), jnp.float32),   # sum_p
                pltpu.VMEM((1, C), jnp.float32),   # one-hot count
            ],
        ),
        compiler_params=pltpu.CompilerParams(
            dimension_semantics=("arbitrary",),    # batch axis is a reduction
        ),
    )(preds, targs2)

    # Macro mean over classes, then 1 - f1 (per-class F1 also available for debugging).
    return 1.0 - jnp.mean(f1)


def f1_loss_ref(preds, targs, eps=EPS):
    """Pure-JAX reference mirroring the PyTorch module (exact softmax divide)."""
    p = jax.nn.softmax(preds.astype(jnp.float32), axis=1)
    C = p.shape[1]
    labels = jnp.arange(C).reshape(-1, 1)                 # (C, 1)
    tb = (targs[None, :] == labels).astype(jnp.float32)   # (C, N)
    pT = p.T                                              # (C, N)
    tp = jnp.sum(tb * pT, axis=1)
    fp = jnp.sum((1.0 - tb) * pT, axis=1)
    fn = jnp.sum(tb * (1.0 - pT), axis=1)
    precision = tp / (tp + fp + eps)
    recall = tp / (tp + fn + eps)
    f1 = 2 * precision * recall / (precision + recall + eps)
    f1 = jnp.clip(f1, eps, 1 - eps)
    return 1.0 - jnp.mean(f1)


if __name__ == "__main__":
    key = jax.random.PRNGKey(0)
    k1, k2 = jax.random.split(key)

    N, C = 8, 32
    preds = jax.random.normal(k1, (N, C), dtype=jnp.float32)
    targs = jax.random.randint(k2, (N,), 0, C, dtype=jnp.int32)

    loss = f1_loss(preds, targs)
    loss = jax.block_until_ready(loss)

    ref = f1_loss_ref(preds, targs)
    # approx reciprocal in the softmax contributes up to ~1e-3 abs error on the loss.
    assert jnp.allclose(loss, ref, atol=2e-3, rtol=2e-3), (loss, ref)

    print("KERNEL_OK")
</pallas_src>

<mosaic_0001>
module attributes {stable_mosaic.version = 11 : i64} {
  func.func @_f1_loss_kernel(%arg0: i32, %arg1: memref<8x32xf32, #tpu.memory_space<vmem>>, %arg2: memref<8x1xi32, #tpu.memory_space<vmem>>, %arg3: memref<1x32xf32, #tpu.memory_space<vmem>>, %arg4: memref<1x32xf32, #tpu.memory_space<vmem>>, %arg5: memref<1x32xf32, #tpu.memory_space<vmem>>, %arg6: memref<1x32xf32, #tpu.memory_space<vmem>>) attributes {dimension_semantics = [#tpu.dimension_semantics<arbitrary>], iteration_bounds = array<i64: 1>, scalar_prefetch = 0 : i64, scratch_operands = 3 : i64, tpu.core_type = #tpu.core_type<tc>, window_params = [{transform_indices = @transform_0, window_bounds = array<i64: 8, 32>}, {transform_indices = @transform_1, window_bounds = array<i64: 8, 1>}, {pipeline_mode = #tpu.pipeline_mode<synchronous>, transform_indices = @transform_2, window_bounds = array<i64: 1, 32>}]} {
    %c0_i32 = arith.constant 0 : i32
    %0 = arith.cmpi eq, %arg0, %c0_i32 : i32
    %1 = arith.extui %0 : i1 to i32
    %c0_i32_0 = arith.constant 0 : i32
    %2 = arith.cmpi ne, %1, %c0_i32_0 : i32
    scf.if %2 {
      %cst_25 = arith.constant 0.000000e+00 : f32
      %52 = vector.broadcast %cst_25 : f32 to vector<1x32xf32>
      %c0_26 = arith.constant 0 : index
      %c0_27 = arith.constant 0 : index
      %53 = vector.load %arg4[%c0_26, %c0_27] : memref<1x32xf32, #tpu.memory_space<vmem>>, vector<1x32xf32>
      tpu.vector_store %arg4[%c0_26, %c0_27], %52 {strides = array<i32>} : memref<1x32xf32, #tpu.memory_space<vmem>>, vector<1x32xf32>,
      %cst_28 = arith.constant 0.000000e+00 : f32
      %54 = vector.broadcast %cst_28 : f32 to vector<1x32xf32>
      %c0_29 = arith.constant 0 : index
      %c0_30 = arith.constant 0 : index
      %55 = vector.load %arg5[%c0_29, %c0_30] : memref<1x32xf32, #tpu.memory_space<vmem>>, vector<1x32xf32>
      tpu.vector_store %arg5[%c0_29, %c0_30], %54 {strides = array<i32>} : memref<1x32xf32, #tpu.memory_space<vmem>>, vector<1x32xf32>,
      %cst_31 = arith.constant 0.000000e+00 : f32
      %56 = vector.broadcast %cst_31 : f32 to vector<1x32xf32>
      %c0_32 = arith.constant 0 : index
      %c0_33 = arith.constant 0 : index
      %57 = vector.load %arg6[%c0_32, %c0_33] : memref<1x32xf32, #tpu.memory_space<vmem>>, vector<1x32xf32>
      tpu.vector_store %arg6[%c0_32, %c0_33], %56 {strides = array<i32>} : memref<1x32xf32, #tpu.memory_space<vmem>>, vector<1x32xf32>,
    } else {
    }
    %c0 = arith.constant 0 : index
    %c0_1 = arith.constant 0 : index
    %3 = vector.load %arg1[%c0, %c0_1] : memref<8x32xf32, #tpu.memory_space<vmem>>, vector<8x32xf32>
    %c0_2 = arith.constant 0 : index
    %c0_3 = arith.constant 0 : index
    %4 = vector.load %arg2[%c0_2, %c0_3] : memref<8x1xi32, #tpu.memory_space<vmem>>, vector<8x1xi32>
    %cst = arith.constant dense<0xFF800000> : vector<8xf32>
    %5 = vector.multi_reduction <maximumf>, %3, %cst [1] : vector<8x32xf32> to vector<8xf32>
    %6 = vector.shape_cast %5 : vector<8xf32> to vector<8x1xf32>
    %7 = vector.broadcast %6 : vector<8x1xf32> to vector<8x32xf32>
    %8 = arith.subf %3, %7 : vector<8x32xf32>
    %9 = math.exp %8 : vector<8x32xf32>
    %cst_4 = arith.constant dense<0.000000e+00> : vector<8xf32>
    %10 = vector.multi_reduction <add>, %9, %cst_4 [1] : vector<8x32xf32> to vector<8xf32>
    %11 = vector.shape_cast %10 : vector<8xf32> to vector<8x1xf32>
    %12 = tpu.reciprocal %11 {approx = true} : vector<8x1xf32> -> vector<8x1xf32>
    %13 = vector.broadcast %12 : vector<8x1xf32> to vector<8x32xf32>
    %14 = arith.mulf %9, %13 : vector<8x32xf32>
    %15 = tpu.iota {dimensions = array<i32: 0>} : vector<8x1xi32>
    %c8_i32 = arith.constant 8 : i32
    %16 = arith.muli %arg0, %c8_i32 : i32
    %17 = vector.broadcast %16 : i32 to vector<8x1xi32>
    %18 = arith.addi %15, %17 : vector<8x1xi32>
    %c8_i32_5 = arith.constant 8 : i32
    %19 = vector.broadcast %c8_i32_5 : i32 to vector<8x1xi32>
    %20 = arith.cmpi slt, %18, %19 : vector<8x1xi32>
    %21 = tpu.iota {dimensions = array<i32: 1>} : vector<8x32xi32>
    %22 = vector.broadcast %4 : vector<8x1xi32> to vector<8x32xi32>
    %23 = arith.cmpi eq, %22, %21 : vector<8x32xi32>
    %24 = vector.broadcast %20 : vector<8x1xi1> to vector<8x32xi1>
    %25 = arith.andi %24, %23 : vector<8x32xi1>
    %cst_6 = arith.constant 0.000000e+00 : f32
    %26 = vector.shape_cast %20 : vector<8x1xi1> to vector<8x1xi1>
    %27 = vector.broadcast %26 : vector<8x1xi1> to vector<8x32xi1>
    %28 = vector.broadcast %cst_6 : f32 to vector<8x32xf32>
    %29 = arith.select %27, %14, %28 : vector<8x32xi1>, vector<8x32xf32>
    %c0_7 = arith.constant 0 : index
    %c0_8 = arith.constant 0 : index
    %30 = vector.load %arg4[%c0_7, %c0_8] : memref<1x32xf32, #tpu.memory_space<vmem>>, vector<1x32xf32>
    %cst_9 = arith.constant 0.000000e+00 : f32
    %31 = vector.broadcast %cst_9 : f32 to vector<8x32xf32>
    %32 = arith.select %25, %29, %31 : vector<8x32xi1>, vector<8x32xf32>
    %cst_10 = arith.constant dense<0.000000e+00> : vector<32xf32>
    %33 = vector.multi_reduction <add>, %32, %cst_10 [0] : vector<8x32xf32> to vector<32xf32>
    %34 = vector.shape_cast %33 : vector<32xf32> to vector<1x32xf32>
    %35 = arith.addf %30, %34 : vector<1x32xf32>
    %c0_11 = arith.constant 0 : index
    %c0_12 = arith.constant 0 : index
    %36 = vector.load %arg4[%c0_11, %c0_12] : memref<1x32xf32, #tpu.memory_space<vmem>>, vector<1x32xf32>
    tpu.vector_store %arg4[%c0_11, %c0_12], %35 {strides = array<i32>} : memref<1x32xf32, #tpu.memory_space<vmem>>, vector<1x32xf32>,
    %c0_13 = arith.constant 0 : index
    %c0_14 = arith.constant 0 : index
    %37 = vector.load %arg5[%c0_13, %c0_14] : memref<1x32xf32, #tpu.memory_space<vmem>>, vector<1x32xf32>
    %cst_15 = arith.constant dense<0.000000e+00> : vector<32xf32>
    %38 = vector.multi_reduction <add>, %29, %cst_15 [0] : vector<8x32xf32> to vector<32xf32>
    %39 = vector.shape_cast %38 : vector<32xf32> to vector<1x32xf32>
    %40 = arith.addf %37, %39 : vector<1x32xf32>
    %c0_16 = arith.constant 0 : index
    %c0_17 = arith.constant 0 : index
    %41 = vector.load %arg5[%c0_16, %c0_17] : memref<1x32xf32, #tpu.memory_space<vmem>>, vector<1x32xf32>
    tpu.vector_store %arg5[%c0_16, %c0_17], %40 {strides = array<i32>} : memref<1x32xf32, #tpu.memory_space<vmem>>, vector<1x32xf32>,
    %c0_18 = arith.constant 0 : index
    %c0_19 = arith.constant 0 : index
    %42 = vector.load %arg6[%c0_18, %c0_19] : memref<1x32xf32, #tpu.memory_space<vmem>>, vector<1x32xf32>
    %43 = arith.extui %25 : vector<8x32xi1> to vector<8x32xi32>
    %44 = arith.sitofp %43 : vector<8x32xi32> to vector<8x32xf32>
    %cst_20 = arith.constant dense<0.000000e+00> : vector<32xf32>
    %45 = vector.multi_reduction <add>, %44, %cst_20 [0] : vector<8x32xf32> to vector<32xf32>
    %46 = vector.shape_cast %45 : vector<32xf32> to vector<1x32xf32>
    %47 = arith.addf %42, %46 : vector<1x32xf32>
    %c0_21 = arith.constant 0 : index
    %c0_22 = arith.constant 0 : index
    %48 = vector.load %arg6[%c0_21, %c0_22] : memref<1x32xf32, #tpu.memory_space<vmem>>, vector<1x32xf32>
    tpu.vector_store %arg6[%c0_21, %c0_22], %47 {strides = array<i32>} : memref<1x32xf32, #tpu.memory_space<vmem>>, vector<1x32xf32>,
    %c0_i32_23 = arith.constant 0 : i32
    %49 = arith.cmpi eq, %arg0, %c0_i32_23 : i32
    %50 = arith.extui %49 : i1 to i32
    %c0_i32_24 = arith.constant 0 : i32
    %51 = arith.cmpi ne, %50, %c0_i32_24 : i32
    scf.if %51 {
      %c0_25 = arith.constant 0 : index
      %c0_26 = arith.constant 0 : index
      %52 = vector.load %arg4[%c0_25, %c0_26] : memref<1x32xf32, #tpu.memory_space<vmem>>, vector<1x32xf32>
      %c0_27 = arith.constant 0 : index
      %c0_28 = arith.constant 0 : index
      %53 = vector.load %arg5[%c0_27, %c0_28] : memref<1x32xf32, #tpu.memory_space<vmem>>, vector<1x32xf32>
      %54 = arith.subf %53, %52 : vector<1x32xf32>
      %c0_29 = arith.constant 0 : index
      %c0_30 = arith.constant 0 : index
      %55 = vector.load %arg6[%c0_29, %c0_30] : memref<1x32xf32, #tpu.memory_space<vmem>>, vector<1x32xf32>
      %56 = arith.subf %55, %52 : vector<1x32xf32>
      %57 = arith.addf %52, %54 : vector<1x32xf32>
      %cst_31 = arith.constant 1.000000e-10 : f32
      %58 = vector.broadcast %cst_31 : f32 to vector<1x32xf32>
      %59 = arith.addf %57, %58 : vector<1x32xf32>
      %60 = arith.divf %52, %59 : vector<1x32xf32>
      %61 = arith.addf %52, %56 : vector<1x32xf32>
      %cst_32 = arith.constant 1.000000e-10 : f32
      %62 = vector.broadcast %cst_32 : f32 to vector<1x32xf32>
      %63 = arith.addf %61, %62 : vector<1x32xf32>
      %64 = arith.divf %52, %63 : vector<1x32xf32>
      %cst_33 = arith.constant 2.000000e+00 : f32
      %65 = vector.broadcast %cst_33 : f32 to vector<1x32xf32>
      %66 = arith.mulf %65, %60 : vector<1x32xf32>
      %67 = arith.mulf %66, %64 : vector<1x32xf32>
      %68 = arith.addf %60, %64 : vector<1x32xf32>
      %cst_34 = arith.constant 1.000000e-10 : f32
      %69 = vector.broadcast %cst_34 : f32 to vector<1x32xf32>
      %70 = arith.addf %68, %69 : vector<1x32xf32>
      %71 = arith.divf %67, %70 : vector<1x32xf32>
      %cst_35 = arith.constant 1.000000e-10 : f32
      %cst_36 = arith.constant 1.000000e+00 : f32
      %72 = vector.broadcast %cst_35 : f32 to vector<1x32xf32>
      %73 = arith.maximumf %72, %71 : vector<1x32xf32>
      %74 = vector.broadcast %cst_36 : f32 to vector<1x32xf32>
      %75 = arith.minimumf %74, %73 : vector<1x32xf32>
      %c0_37 = arith.constant 0 : index
      %c0_38 = arith.constant 0 : index
      %76 = vector.load %arg3[%c0_37, %c0_38] : memref<1x32xf32, #tpu.memory_space<vmem>>, vector<1x32xf32>
      tpu.vector_store %arg3[%c0_37, %c0_38], %75 {strides = array<i32>} : memref<1x32xf32, #tpu.memory_space<vmem>>, vector<1x32xf32>,
    } else {
    }
    return
  }
  func.func @transform_0(%arg0: i32) -> (i32, i32) {
    %c0_i32 = arith.constant 0 : i32
    %c0_i32_0 = arith.constant 0 : i32
    return %arg0, %c0_i32 : i32, i32
  }
  func.func @transform_1(%arg0: i32) -> (i32, i32) {
    %c0_i32 = arith.constant 0 : i32
    %c0_i32_0 = arith.constant 0 : i32
    return %arg0, %c0_i32 : i32, i32
  }
  func.func @transform_2(%arg0: i32) -> (i32, i32) {
    %c0_i32 = arith.constant 0 : i32
    %c0_i32_0 = arith.constant 0 : i32
    %c0_i32_1 = arith.constant 0 : i32
    return %c0_i32, %c0_i32_0 : i32, i32
  }
}

</mosaic_0001>

<llo_original>
// kernel: tpu_custom_call.1
$region0: #{tpu_custom_call.1}
  #allocation0 [shape = 'u32[]', space=smem, size = 0x4, offset = 0x4, fixed_abs, tag = 'smem constant byte address 0x4 - core index']
  #allocation1 [shape = 'u32[144,128]{1,0:T(1,128)}', space=vmem, size = 0x12000, scoped, tag = 'internal scratch']
  #allocation2 [shape = 'f32[1,32]{1,0:T(1,128)}', space=vmem, size = 0x200, scoped, tag = 'scratch operand']
  #allocation3 [shape = 'f32[1,32]{1,0:T(1,128)}', space=vmem, size = 0x200, scoped, tag = 'scratch operand']
  #allocation4 [shape = 'f32[1,32]{1,0:T(1,128)}', space=vmem, size = 0x200, scoped, tag = 'scratch operand']
  %s0 = inlined_call_operand.vmem [shape: f32[8,32], index: 0, kind: input, shape index: {}]
  %s1 = inlined_call_operand.vmem [shape: s32[8,1], index: 1, kind: input, shape index: {}]
  %s2 = inlined_call_operand.hbm [shape: f32[1,32], index: 2, kind: output, shape index: {}]
  %s3 = sld [smem:[#allocation0]]
  $region26: #{tpu_custom_call.1} parent=0
    _
  %s5 = ssub.s32 1, %s3
  %s6 = scalar_select 0, %s5, %s3
  $region1: #{tpu_custom_call.1} parent=0
    #allocation5 [shape = 'u8[512]{0}', space=vmem, size = 0x400, scoped, tag = 'output window, operand 0, single buffered']
    #allocation6 [shape = 's32[1]{0}', space=sflag, size = 0x4, scoped, tag = 'scoped memory for tpu_custom_call.1']
    %7 = vsyncpa [#allocation6], 0
    // Predicated region
    $region2: #{tpu_custom_call.1} parent=1 // pred_check
      _
    $region3: #{tpu_custom_call.1} parent=1 // pred_check_branch
      %9 = sbr.rel (0) target = $region5
    $region4: #{tpu_custom_call.1} parent=1 // pred_region
      _
    $region5: #{tpu_custom_call.1} parent=1 // pred_fallthru
      _
    // Predicated region
    $region6: #{tpu_custom_call.1} parent=1 // pred_check
      _
    $region7: #{tpu_custom_call.1} parent=1 // pred_check_branch
      %11 = sbr.rel (0) target = $region9
    $region8: #{tpu_custom_call.1} parent=1 // pred_region
      _
    $region9: #{tpu_custom_call.1} parent=1 // pred_fallthru
      _
    %p12 = scmp.eq.s32.totalorder 0, 0
    // Predicated region
    $region10: #{tpu_custom_call.1} parent=1 // pred_check
      %p13 = pneg %p12
    $region11: #{tpu_custom_call.1} parent=1 // pred_check_branch
      %15 = sbr.rel (%p13) target = $region13
    $region12: #{tpu_custom_call.1} parent=1 // pred_region
      %vm16 = vcmask 253952
      %17 = vst.msk [vmem:[#allocation2] sm:$0x1] %vm16, 0.0
      %18 = vst.msk [vmem:[#allocation3] sm:$0x1] %vm16, 0.0
      %19 = vst.msk [vmem:[#allocation4] sm:$0x1] %vm16, 0.0
    $region13: #{tpu_custom_call.1} parent=1 // pred_fallthru
      _
    %v20 = vld [vmem:[%s0] sm:$0xff]
    %v21 = vld [vmem:[%s1] sm:$0xff]
    %vm22 = vcmask 261120
    %v23 = vsel %vm22, %v20, -inf
    %24 = vmax.xlane.f32.xlu0 %v23
    %v25 = vpop.xlane.xlu0 %24
    %v26 = vsub.f32 %v20, %v25
    %v27 = vmul.f32 %v26, 1.442695
    %v28 = vpow.pop %v27
    %v29 = vsel %vm22, %v28, 0.0
    %30 = vadd.xlane.f32.xlu0 %v29
    %v31 = vpop.xlane.xlu0 %30
    %v32 = vrcp.pop %v31
    %v33 = vmul.f32 %v28, %v32
    %v34 = vlaneseq
    %v35 = vshrl.u32 %v34, 7
    %s36 = smul.u32 0, 8
    %v37 = vstv %s36
    %v38 = vadd.s32 %v35, %v37
    %vm39 = vcmp.lt.s32.totalorder %v38, 8
    %v40 = vlaneseq
    %v41 = vand.u32 %v40, 127
    %42 = vset.pattern.permute.xlu0 0
    %43 = vperm.xlu0 %42, %v21
    %v44 = vpop.permute.xlu0 %43
    %vm45 = vcmp.eq.s32.totalorder %v44, %v41
    %v46 = vsel %vm39, 1, 0
    %vm47 = vcmp.eq.s32.totalorder %v46, 1
    %vm48 = vmand %vm47, %vm45
    %v49 = vsel %vm47, %v33, 0.0
    %v50 = vld [vmem:[#allocation2] sm:$0x1]
    %v51 = vsel %vm48, %v49, 0.0
    %v52 = vsel %vm22, %v51, 0.0
    %v53 = vrot.slane %v52, 4
    %v54 = vadd.f32 %v52, %v53
    %v55 = vrot.slane %v54, 2
    %v56 = vadd.f32 %v54, %v55
    %v57 = vrot.slane %v56, 1
    %v58 = vadd.f32 %v56, %v57
    %v59 = vadd.f32 %v50, %v58
    %vm60 = vcmask 253952
    %61 = vst.msk [vmem:[#allocation2] sm:$0x1] %vm60, %v59
    %v62 = vld [vmem:[#allocation3] sm:$0x1]
    %v63 = vsel %vm22, %v49, 0.0
    %v64 = vrot.slane %v63, 4
    %v65 = vadd.f32 %v63, %v64
    %v66 = vrot.slane %v65, 2
    %v67 = vadd.f32 %v65, %v66
    %v68 = vrot.slane %v67, 1
    %v69 = vadd.f32 %v67, %v68
    %v70 = vadd.f32 %v62, %v69
    %71 = vst.msk [vmem:[#allocation3] sm:$0x1] %vm60, %v70
    %v72 = vld [vmem:[#allocation4] sm:$0x1]
    %v73 = vsel %vm48, 1, 0
    %v74 = vcvt.s32.f32 %v73
    %v75 = vsel %vm22, %v74, 0.0
    %v76 = vrot.slane %v75, 4
    %v77 = vadd.f32 %v75, %v76
    %v78 = vrot.slane %v77, 2
    %v79 = vadd.f32 %v77, %v78
    %v80 = vrot.slane %v79, 1
    %v81 = vadd.f32 %v79, %v80
    %v82 = vadd.f32 %v72, %v81
    %83 = vst.msk [vmem:[#allocation4] sm:$0x1] %vm60, %v82
    // Predicated region
    $region14: #{tpu_custom_call.1} parent=1 // pred_check
      %p84 = pneg %p12
    $region15: #{tpu_custom_call.1} parent=1 // pred_check_branch
      %86 = sbr.rel (%p84) target = $region17
    $region16: #{tpu_custom_call.1} parent=1 // pred_region
      %v87 = vld [vmem:[#allocation2] sm:$0x1]
      %v88 = vld [vmem:[#allocation3] sm:$0x1]
      %v89 = vsub.f32 %v88, %v87
      %v90 = vld [vmem:[#allocation4] sm:$0x1]
      %v91 = vsub.f32 %v90, %v87
      %v92 = vadd.f32 %v87, %v89
      %v93 = vadd.f32 %v92, 1e-10
      %v94 = vrcp.pop %v93
      %v95 = vmul.f32 %v87, %v94
      %v96 = vadd.f32 %v87, %v91
      %v97 = vadd.f32 %v96, 1e-10
      %v98 = vrcp.pop %v97
      %v99 = vmul.f32 %v87, %v98
      %v100 = vmul.f32 %v95, 2.0
      %v101 = vmul.f32 %v100, %v99
      %v102 = vadd.f32 %v95, %v99
      %v103 = vadd.f32 %v102, 1e-10
      %v104 = vrcp.pop %v103
      %v105 = vmul.f32 %v101, %v104
      %v106 = vmax.f32 %v105, 1e-10
      %v107 = vmin.f32 %v106, 1.0
      %108 = vst.msk [vmem:[#allocation5] sm:$0x1] %vm60, %v107
    $region17: #{tpu_custom_call.1} parent=1 // pred_fallthru
      _
    // Predicated region
    $region18: #{tpu_custom_call.1} parent=1 // pred_check
      _
    $region19: #{tpu_custom_call.1} parent=1 // pred_check_branch
      %110 = sbr.rel (0) target = $region21
    $region20: #{tpu_custom_call.1} parent=1 // pred_region
      %s112 = ssub.s32 16, 16
      %113 = vsyncadd [#allocation6], %s112
      %s115 = sshll.u32 [#allocation5], 4
      %s116 = int_to_ptr.vmem [resolvable:$true] %s115
      %118 = dma.vmem_to_hbm [thread:$0]  %s116, 16, %s2, [#allocation6]
    $region21: #{tpu_custom_call.1} parent=1 // pred_fallthru
      _
    // Predicated region
    $region22: #{tpu_custom_call.1} parent=1 // pred_check
      _
    $region23: #{tpu_custom_call.1} parent=1 // pred_check_branch
      %120 = sbr.rel (0) target = $region25
    $region24: #{tpu_custom_call.1} parent=1 // pred_region
      %121 = dma.done [#allocation6], 16
    $region25: #{tpu_custom_call.1} parent=1 // pred_fallthru
      _
    %122 = vsyncpa [#allocation6], 1

</llo_original>
